<compile_context>
chip_gen: v6e
topology: v6e:2x2x1
jax: 0.10.0
libtpu: 0.0.40
codegen_flags: <defaults>
</compile_context>

<pallas_src>
import functools

import jax
import jax.numpy as jnp
import numpy as np
from jax.experimental import pallas as pl
from jax.experimental.pallas import tpu as pltpu

LOG_STD_MAX = 2.0
LOG_STD_MIN = -5.0


def _round_up(n, m):
    return ((n + m - 1) // m) * m


def actor_kernel(x_ref, w1_ref, b1_ref, w2_ref, b2_ref, wcat_ref, bcat_ref,
                 out_ref, *, f_in, context_dim, action_dim):
    A = action_dim
    C = context_dim

    x = x_ref[...]                                   # (TB, f_in + C) — one vreg wide

    # ---- trunk MLP (ctx rows of w1 are zero, so the whole x can feed it) ----
    h1 = jnp.dot(x, w1_ref[...], preferred_element_type=jnp.float32) + b1_ref[...]
    h1 = jnp.maximum(h1, 0.0)
    h2 = jnp.dot(h1, w2_ref[...], preferred_element_type=jnp.float32) + b2_ref[...]

    # ---- single fused projection of h2:
    #      columns [0:A)        -> mean base   = h2 @ (wm + hw0) + (bm + hb0)
    #      columns [A:2A)       -> logstd pre  = h2 @ wl + bl
    #      columns [2A:2A+C*A)  -> hypernet    = h2 @ hw[c] + hbw[c]   (per c)
    big = jnp.dot(h2, wcat_ref[...], preferred_element_type=jnp.float32) + bcat_ref[...]

    mean = big[:, :A]
    # adapter: sum_c ctx_c * (h2 @ hw[c] + hbw[c])  — pure VPU lane-slice mul-adds.
    for c in range(C):
        ctx_c = x[:, f_in + c: f_in + c + 1]
        mean = mean + ctx_c * big[:, 2 * A + c * A: 2 * A + (c + 1) * A]

    ls = jnp.tanh(big[:, A:2 * A])
    log_std = LOG_STD_MIN + 0.5 * (LOG_STD_MAX - LOG_STD_MIN) * (ls + 1.0)

    # single packed (TB, 2A) store: [mean | log_std]
    out_ref[...] = jnp.concatenate([mean, log_std], axis=1)


def actor_forward(x, params, context_dim, tile_b=512):
    """x: (B, obs_dim) with the context as the last `context_dim` columns."""
    B, F = x.shape
    C = context_dim
    f_in = F - C
    H = params["w1"].shape[1]
    A = params["wm"].shape[1]
    dt = jnp.float32

    # ---- host-side weight fusion (tiny arrays; constant-folds under jit) ----
    # zero-pad the ctx rows of w1 so the kernel can consume x whole
    w1e = jnp.concatenate([params["w1"], jnp.zeros((C, H), dt)], axis=0)        # (F, H)
    # hw_p[f, c*A + a] = hw[c, f, a]
    hw_p = jnp.transpose(params["hw"], (1, 0, 2)).reshape(H, C * A)             # (H, C*A)
    w_cat = jnp.concatenate(
        [params["wm"] + params["hw0"], params["wl"], hw_p], axis=1)             # (H, 2A + C*A)
    b_cat = jnp.concatenate(
        [params["bm"] + params["hb0"], params["bl"],
         params["hbw"].reshape(1, C * A)], axis=1)                              # (1, 2A + C*A)

    # ---- batch tiling: pad B up to a multiple of the (8-aligned) batch tile ----
    assert tile_b % 8 == 0
    tb = max(8, min(tile_b, _round_up(B, 8)))
    B_pad = _round_up(B, tb)
    if B_pad != B:
        x = jnp.pad(x, ((0, B_pad - B), (0, 0)))

    n_out = 2 * A
    kernel = functools.partial(actor_kernel, f_in=f_in, context_dim=C, action_dim=A)
    const = lambda i: (0, 0)   # weights stay resident in VMEM across batch tiles

    out = pl.pallas_call(
        kernel,
        out_shape=jax.ShapeDtypeStruct((B_pad, n_out), jnp.float32),
        grid=(B_pad // tb,),
        in_specs=[
            pl.BlockSpec((tb, F), lambda i: (i, 0)),       # x
            pl.BlockSpec((F, H), const),                   # w1 (ctx rows zeroed)
            pl.BlockSpec((1, H), const),                   # b1
            pl.BlockSpec((H, H), const),                   # w2
            pl.BlockSpec((1, H), const),                   # b2
            pl.BlockSpec((H, n_out + C * A), const),       # fused W_cat
            pl.BlockSpec((1, n_out + C * A), const),       # fused b_cat
        ],
        out_specs=pl.BlockSpec((tb, n_out), lambda i: (i, 0)),
        compiler_params=pltpu.CompilerParams(dimension_semantics=("parallel",)),
    )(x, w1e, params["b1"], params["w2"], params["b2"], w_cat, b_cat)

    out = out[:B]
    return out[:, :A], out[:, A:]


def reference_forward(x, params, context_dim):
    """Plain-JAX reference with identical math (unfused)."""
    x_obs = x[:, :-context_dim]
    ctx = x[:, -context_dim:]
    h1 = jnp.maximum(x_obs @ params["w1"] + params["b1"], 0.0)
    h2 = h1 @ params["w2"] + params["b2"]
    mean = h2 @ params["wm"] + params["bm"]
    w_gen = params["hw0"][None] + jnp.einsum("bc,cfa->bfa", ctx, params["hw"])
    adapter = jnp.einsum("bf,bfa->ba", h2, w_gen) + ctx @ params["hbw"] + params["hb0"]
    mean = mean + adapter
    ls = jnp.tanh(h2 @ params["wl"] + params["bl"])
    log_std = LOG_STD_MIN + 0.5 * (LOG_STD_MAX - LOG_STD_MIN) * (ls + 1.0)
    return mean, log_std


def init_params(key, f_in, hidden, context_dim, action_dim):
    ks = jax.random.split(key, 12)
    s = 0.1
    return {
        "w1": s * jax.random.normal(ks[0], (f_in, hidden), jnp.float32),
        "b1": s * jax.random.normal(ks[1], (1, hidden), jnp.float32),
        "w2": s * jax.random.normal(ks[2], (hidden, hidden), jnp.float32),
        "b2": s * jax.random.normal(ks[3], (1, hidden), jnp.float32),
        "wm": s * jax.random.normal(ks[4], (hidden, action_dim), jnp.float32),
        "bm": s * jax.random.normal(ks[5], (1, action_dim), jnp.float32),
        # hypernetwork: generated weight = hw0 + sum_c ctx_c*hw[c]; bias = ctx@hbw + hb0
        "hw": s * jax.random.normal(ks[6], (context_dim, hidden, action_dim), jnp.float32),
        "hw0": s * jax.random.normal(ks[7], (hidden, action_dim), jnp.float32),
        "hbw": s * jax.random.normal(ks[8], (context_dim, action_dim), jnp.float32),
        "hb0": s * jax.random.normal(ks[9], (1, action_dim), jnp.float32),
        "wl": s * jax.random.normal(ks[10], (hidden, action_dim), jnp.float32),
        "bl": s * jax.random.normal(ks[11], (1, action_dim), jnp.float32),
    }


if __name__ == "__main__":
    context_dim = 8  # context dims appended to the observation
    f_in = 24        # observation features (obs_dim - context_dim)
    hidden = 32      # net_arch = [32, 32]
    action_dim = 4

    key = jax.random.PRNGKey(0)
    k_x, k_p, k_x2 = jax.random.split(key, 3)
    params = init_params(k_p, f_in, hidden, context_dim, action_dim)

    # ---- small-batch check (single grid step) ----
    B = 8
    x = jax.random.normal(k_x, (B, f_in + context_dim), jnp.float32)
    mean, log_std = actor_forward(x, params, context_dim)
    mean, log_std = jax.block_until_ready((mean, log_std))
    mean_ref, log_std_ref = reference_forward(x, params, context_dim)
    assert mean.shape == (B, action_dim) and log_std.shape == (B, action_dim)
    assert np.allclose(np.asarray(mean), np.asarray(mean_ref), atol=1e-4, rtol=1e-4)
    assert np.allclose(np.asarray(log_std), np.asarray(log_std_ref), atol=1e-4, rtol=1e-4)
    assert float(np.max(log_std)) <= LOG_STD_MAX and float(np.min(log_std)) >= LOG_STD_MIN

    # ---- multi-tile check (exercises the batch grid + parallel semantics) ----
    B2 = 64
    x2 = jax.random.normal(k_x2, (B2, f_in + context_dim), jnp.float32)
    mean2, log_std2 = actor_forward(x2, params, context_dim, tile_b=16)   # grid = (4,)
    mean2, log_std2 = jax.block_until_ready((mean2, log_std2))
    mean2_ref, log_std2_ref = reference_forward(x2, params, context_dim)
    assert np.allclose(np.asarray(mean2), np.asarray(mean2_ref), atol=1e-4, rtol=1e-4)
    assert np.allclose(np.asarray(log_std2), np.asarray(log_std2_ref), atol=1e-4, rtol=1e-4)

    print("KERNEL_OK")
</pallas_src>

<mosaic_0001>
module attributes {stable_mosaic.version = 11 : i64} {
  func.func @actor_kernel(%arg0: i32, %arg1: memref<8x32xf32, #tpu.memory_space<vmem>>, %arg2: memref<32x32xf32, #tpu.memory_space<vmem>>, %arg3: memref<1x32xf32, #tpu.memory_space<vmem>>, %arg4: memref<32x32xf32, #tpu.memory_space<vmem>>, %arg5: memref<1x32xf32, #tpu.memory_space<vmem>>, %arg6: memref<32x40xf32, #tpu.memory_space<vmem>>, %arg7: memref<1x40xf32, #tpu.memory_space<vmem>>, %arg8: memref<8x8xf32, #tpu.memory_space<vmem>>) attributes {dimension_semantics = [#tpu.dimension_semantics<parallel>], iteration_bounds = array<i64: 1>, scalar_prefetch = 0 : i64, scratch_operands = 0 : i64, tpu.core_type = #tpu.core_type<tc>, window_params = [{transform_indices = @transform_0, window_bounds = array<i64: 8, 32>}, {pipeline_mode = #tpu.pipeline_mode<synchronous>, transform_indices = @transform_1, window_bounds = array<i64: 32, 32>}, {pipeline_mode = #tpu.pipeline_mode<synchronous>, transform_indices = @transform_2, window_bounds = array<i64: 1, 32>}, {pipeline_mode = #tpu.pipeline_mode<synchronous>, transform_indices = @transform_3, window_bounds = array<i64: 32, 32>}, {pipeline_mode = #tpu.pipeline_mode<synchronous>, transform_indices = @transform_4, window_bounds = array<i64: 1, 32>}, {pipeline_mode = #tpu.pipeline_mode<synchronous>, transform_indices = @transform_5, window_bounds = array<i64: 32, 40>}, {pipeline_mode = #tpu.pipeline_mode<synchronous>, transform_indices = @transform_6, window_bounds = array<i64: 1, 40>}, {transform_indices = @transform_7, window_bounds = array<i64: 8, 8>}]} {
    %c0 = arith.constant 0 : index
    %c0_0 = arith.constant 0 : index
    %0 = vector.load %arg1[%c0, %c0_0] : memref<8x32xf32, #tpu.memory_space<vmem>>, vector<8x32xf32>
    %c0_1 = arith.constant 0 : index
    %c0_2 = arith.constant 0 : index
    %1 = vector.load %arg2[%c0_1, %c0_2] : memref<32x32xf32, #tpu.memory_space<vmem>>, vector<32x32xf32>
    %cst = arith.constant dense<0.000000e+00> : vector<8x32xf32>
    %2 = tpu.matmul %0, %1, %cst {dimension_numbers = #tpu.dot_dimension_numbers<[1], [0], [0], [1], [0, 0, 1, 1], [], []>} : vector<8x32xf32>, vector<32x32xf32>, vector<8x32xf32> -> vector<8x32xf32>
    %c0_3 = arith.constant 0 : index
    %c0_4 = arith.constant 0 : index
    %3 = vector.load %arg3[%c0_3, %c0_4] : memref<1x32xf32, #tpu.memory_space<vmem>>, vector<1x32xf32>
    %4 = vector.broadcast %3 : vector<1x32xf32> to vector<8x32xf32>
    %5 = arith.addf %2, %4 : vector<8x32xf32>
    %cst_5 = arith.constant 0.000000e+00 : f32
    %6 = vector.broadcast %cst_5 : f32 to vector<8x32xf32>
    %7 = arith.maximumf %5, %6 : vector<8x32xf32>
    %c0_6 = arith.constant 0 : index
    %c0_7 = arith.constant 0 : index
    %8 = vector.load %arg4[%c0_6, %c0_7] : memref<32x32xf32, #tpu.memory_space<vmem>>, vector<32x32xf32>
    %cst_8 = arith.constant dense<0.000000e+00> : vector<8x32xf32>
    %9 = tpu.matmul %7, %8, %cst_8 {dimension_numbers = #tpu.dot_dimension_numbers<[1], [0], [0], [1], [0, 0, 1, 1], [], []>} : vector<8x32xf32>, vector<32x32xf32>, vector<8x32xf32> -> vector<8x32xf32>
    %c0_9 = arith.constant 0 : index
    %c0_10 = arith.constant 0 : index
    %10 = vector.load %arg5[%c0_9, %c0_10] : memref<1x32xf32, #tpu.memory_space<vmem>>, vector<1x32xf32>
    %11 = vector.broadcast %10 : vector<1x32xf32> to vector<8x32xf32>
    %12 = arith.addf %9, %11 : vector<8x32xf32>
    %c0_11 = arith.constant 0 : index
    %c0_12 = arith.constant 0 : index
    %13 = vector.load %arg6[%c0_11, %c0_12] : memref<32x40xf32, #tpu.memory_space<vmem>>, vector<32x40xf32>
    %cst_13 = arith.constant dense<0.000000e+00> : vector<8x40xf32>
    %14 = tpu.matmul %12, %13, %cst_13 {dimension_numbers = #tpu.dot_dimension_numbers<[1], [0], [0], [1], [0, 0, 1, 1], [], []>} : vector<8x32xf32>, vector<32x40xf32>, vector<8x40xf32> -> vector<8x40xf32>
    %c0_14 = arith.constant 0 : index
    %c0_15 = arith.constant 0 : index
    %15 = vector.load %arg7[%c0_14, %c0_15] : memref<1x40xf32, #tpu.memory_space<vmem>>, vector<1x40xf32>
    %16 = vector.broadcast %15 : vector<1x40xf32> to vector<8x40xf32>
    %17 = arith.addf %14, %16 : vector<8x40xf32>
    %18 = vector.extract_strided_slice %17 {offsets = [0, 0], sizes = [8, 4], strides = [1, 1]} : vector<8x40xf32> to vector<8x4xf32>
    %19 = vector.extract_strided_slice %0 {offsets = [0, 24], sizes = [8, 1], strides = [1, 1]} : vector<8x32xf32> to vector<8x1xf32>
    %20 = vector.extract_strided_slice %17 {offsets = [0, 8], sizes = [8, 4], strides = [1, 1]} : vector<8x40xf32> to vector<8x4xf32>
    %21 = vector.broadcast %19 : vector<8x1xf32> to vector<8x4xf32>
    %22 = arith.mulf %21, %20 : vector<8x4xf32>
    %23 = arith.addf %18, %22 : vector<8x4xf32>
    %24 = vector.extract_strided_slice %0 {offsets = [0, 25], sizes = [8, 1], strides = [1, 1]} : vector<8x32xf32> to vector<8x1xf32>
    %25 = vector.extract_strided_slice %17 {offsets = [0, 12], sizes = [8, 4], strides = [1, 1]} : vector<8x40xf32> to vector<8x4xf32>
    %26 = vector.broadcast %24 : vector<8x1xf32> to vector<8x4xf32>
    %27 = arith.mulf %26, %25 : vector<8x4xf32>
    %28 = arith.addf %23, %27 : vector<8x4xf32>
    %29 = vector.extract_strided_slice %0 {offsets = [0, 26], sizes = [8, 1], strides = [1, 1]} : vector<8x32xf32> to vector<8x1xf32>
    %30 = vector.extract_strided_slice %17 {offsets = [0, 16], sizes = [8, 4], strides = [1, 1]} : vector<8x40xf32> to vector<8x4xf32>
    %31 = vector.broadcast %29 : vector<8x1xf32> to vector<8x4xf32>
    %32 = arith.mulf %31, %30 : vector<8x4xf32>
    %33 = arith.addf %28, %32 : vector<8x4xf32>
    %34 = vector.extract_strided_slice %0 {offsets = [0, 27], sizes = [8, 1], strides = [1, 1]} : vector<8x32xf32> to vector<8x1xf32>
    %35 = vector.extract_strided_slice %17 {offsets = [0, 20], sizes = [8, 4], strides = [1, 1]} : vector<8x40xf32> to vector<8x4xf32>
    %36 = vector.broadcast %34 : vector<8x1xf32> to vector<8x4xf32>
    %37 = arith.mulf %36, %35 : vector<8x4xf32>
    %38 = arith.addf %33, %37 : vector<8x4xf32>
    %39 = vector.extract_strided_slice %0 {offsets = [0, 28], sizes = [8, 1], strides = [1, 1]} : vector<8x32xf32> to vector<8x1xf32>
    %40 = vector.extract_strided_slice %17 {offsets = [0, 24], sizes = [8, 4], strides = [1, 1]} : vector<8x40xf32> to vector<8x4xf32>
    %41 = vector.broadcast %39 : vector<8x1xf32> to vector<8x4xf32>
    %42 = arith.mulf %41, %40 : vector<8x4xf32>
    %43 = arith.addf %38, %42 : vector<8x4xf32>
    %44 = vector.extract_strided_slice %0 {offsets = [0, 29], sizes = [8, 1], strides = [1, 1]} : vector<8x32xf32> to vector<8x1xf32>
    %45 = vector.extract_strided_slice %17 {offsets = [0, 28], sizes = [8, 4], strides = [1, 1]} : vector<8x40xf32> to vector<8x4xf32>
    %46 = vector.broadcast %44 : vector<8x1xf32> to vector<8x4xf32>
    %47 = arith.mulf %46, %45 : vector<8x4xf32>
    %48 = arith.addf %43, %47 : vector<8x4xf32>
    %49 = vector.extract_strided_slice %0 {offsets = [0, 30], sizes = [8, 1], strides = [1, 1]} : vector<8x32xf32> to vector<8x1xf32>
    %50 = vector.extract_strided_slice %17 {offsets = [0, 32], sizes = [8, 4], strides = [1, 1]} : vector<8x40xf32> to vector<8x4xf32>
    %51 = vector.broadcast %49 : vector<8x1xf32> to vector<8x4xf32>
    %52 = arith.mulf %51, %50 : vector<8x4xf32>
    %53 = arith.addf %48, %52 : vector<8x4xf32>
    %54 = vector.extract_strided_slice %0 {offsets = [0, 31], sizes = [8, 1], strides = [1, 1]} : vector<8x32xf32> to vector<8x1xf32>
    %55 = vector.extract_strided_slice %17 {offsets = [0, 36], sizes = [8, 4], strides = [1, 1]} : vector<8x40xf32> to vector<8x4xf32>
    %56 = vector.broadcast %54 : vector<8x1xf32> to vector<8x4xf32>
    %57 = arith.mulf %56, %55 : vector<8x4xf32>
    %58 = arith.addf %53, %57 : vector<8x4xf32>
    %59 = vector.extract_strided_slice %17 {offsets = [0, 4], sizes = [8, 4], strides = [1, 1]} : vector<8x40xf32> to vector<8x4xf32>
    %60 = math.tanh %59 : vector<8x4xf32>
    %cst_16 = arith.constant 1.000000e+00 : f32
    %61 = vector.broadcast %cst_16 : f32 to vector<8x4xf32>
    %62 = arith.addf %60, %61 : vector<8x4xf32>
    %cst_17 = arith.constant 3.500000e+00 : f32
    %63 = vector.broadcast %cst_17 : f32 to vector<8x4xf32>
    %64 = arith.mulf %63, %62 : vector<8x4xf32>
    %cst_18 = arith.constant -5.000000e+00 : f32
    %65 = vector.broadcast %cst_18 : f32 to vector<8x4xf32>
    %66 = arith.addf %65, %64 : vector<8x4xf32>
    %67 = tpu.concatenate %58, %66 in 1 : vector<8x4xf32>, vector<8x4xf32> -> vector<8x8xf32>
    %c0_19 = arith.constant 0 : index
    %c0_20 = arith.constant 0 : index
    %68 = vector.load %arg8[%c0_19, %c0_20] : memref<8x8xf32, #tpu.memory_space<vmem>>, vector<8x8xf32>
    tpu.vector_store %arg8[%c0_19, %c0_20], %67 {strides = array<i32>} : memref<8x8xf32, #tpu.memory_space<vmem>>, vector<8x8xf32>,
    return
  }
  func.func @transform_0(%arg0: i32) -> (i32, i32) {
    %c0_i32 = arith.constant 0 : i32
    %c0_i32_0 = arith.constant 0 : i32
    return %arg0, %c0_i32 : i32, i32
  }
  func.func @transform_1(%arg0: i32) -> (i32, i32) {
    %c0_i32 = arith.constant 0 : i32
    %c0_i32_0 = arith.constant 0 : i32
    %c0_i32_1 = arith.constant 0 : i32
    return %c0_i32, %c0_i32_0 : i32, i32
  }
  func.func @transform_2(%arg0: i32) -> (i32, i32) {
    %c0_i32 = arith.constant 0 : i32
    %c0_i32_0 = arith.constant 0 : i32
    %c0_i32_1 = arith.constant 0 : i32
    return %c0_i32, %c0_i32_0 : i32, i32
  }
  func.func @transform_3(%arg0: i32) -> (i32, i32) {
    %c0_i32 = arith.constant 0 : i32
    %c0_i32_0 = arith.constant 0 : i32
    %c0_i32_1 = arith.constant 0 : i32
    return %c0_i32, %c0_i32_0 : i32, i32
  }
  func.func @transform_4(%arg0: i32) -> (i32, i32) {
    %c0_i32 = arith.constant 0 : i32
    %c0_i32_0 = arith.constant 0 : i32
    %c0_i32_1 = arith.constant 0 : i32
    return %c0_i32, %c0_i32_0 : i32, i32
  }
  func.func @transform_5(%arg0: i32) -> (i32, i32) {
    %c0_i32 = arith.constant 0 : i32
    %c0_i32_0 = arith.constant 0 : i32
    %c0_i32_1 = arith.constant 0 : i32
    return %c0_i32, %c0_i32_0 : i32, i32
  }
  func.func @transform_6(%arg0: i32) -> (i32, i32) {
    %c0_i32 = arith.constant 0 : i32
    %c0_i32_0 = arith.constant 0 : i32
    %c0_i32_1 = arith.constant 0 : i32
    return %c0_i32, %c0_i32_0 : i32, i32
  }
  func.func @transform_7(%arg0: i32) -> (i32, i32) {
    %c0_i32 = arith.constant 0 : i32
    %c0_i32_0 = arith.constant 0 : i32
    return %arg0, %c0_i32 : i32, i32
  }
}

</mosaic_0001>

<llo_original>
// kernel: tpu_custom_call.1
$region0: #{tpu_custom_call.1}
  #allocation0 [shape = 'u32[]', space=smem, size = 0x4, offset = 0x4, fixed_abs, tag = 'smem constant byte address 0x4 - core index']
  #allocation1 [shape = 'u32[144,128]{1,0:T(1,128)}', space=vmem, size = 0x12000, scoped, tag = 'internal scratch']
  %s0 = inlined_call_operand.hbm [shape: f32[8,32], index: 0, kind: input, shape index: {}]
  %s1 = inlined_call_operand.hbm [shape: f32[32,32], index: 1, kind: input, shape index: {}]
  %s2 = inlined_call_operand.vmem [shape: f32[1,32], index: 2, kind: input, shape index: {}]
  %s3 = inlined_call_operand.hbm [shape: f32[32,32], index: 3, kind: input, shape index: {}]
  %s4 = inlined_call_operand.vmem [shape: f32[1,32], index: 4, kind: input, shape index: {}]
  %s5 = inlined_call_operand.hbm [shape: f32[32,40], index: 5, kind: input, shape index: {}]
  %s6 = inlined_call_operand.vmem [shape: f32[1,40], index: 6, kind: input, shape index: {}]
  %s7 = inlined_call_operand.hbm [shape: f32[8,8], index: 7, kind: output, shape index: {}]
  %s8 = sld [smem:[#allocation0]]
  $region54: #{tpu_custom_call.1} parent=0
    _
  %s10 = ssub.s32 1, %s8
  %s11 = scalar_select 0, %s10, %s8
  $region1: #{tpu_custom_call.1} parent=0
    #allocation2 [shape = 'u8[4096]{0}', space=vmem, size = 0x1000, scoped, tag = 'input window, operand 0, single buffered']
    #allocation3 [shape = 's32[1]{0}', space=sflag, size = 0x4, scoped, tag = 'scoped memory for tpu_custom_call.1']
    #allocation4 [shape = 's32[1]{0}', space=sflag, size = 0x4, scoped, tag = 'scoped memory for tpu_custom_call.1']
    #allocation5 [shape = 'u8[16384]{0}', space=vmem, size = 0x4000, scoped, tag = 'input window, operand 1, single buffered']
    #allocation6 [shape = 's32[1]{0}', space=sflag, size = 0x4, scoped, tag = 'scoped memory for tpu_custom_call.1']
    #allocation7 [shape = 'u8[16384]{0}', space=vmem, size = 0x4000, scoped, tag = 'input window, operand 3, single buffered']
    #allocation8 [shape = 'u8[16384]{0}', space=vmem, size = 0x4000, scoped, tag = 'input window, operand 5, single buffered']
    #allocation9 [shape = 's32[1]{0}', space=sflag, size = 0x4, scoped, tag = 'scoped memory for tpu_custom_call.1']
    #allocation10 [shape = 'u8[4096]{0}', space=vmem, size = 0x1000, scoped, tag = 'output window, operand 0, single buffered']
    %12 = vsyncpa [#allocation3], 0
    %13 = vsyncpa [#allocation6], 0
    %14 = vsyncpa [#allocation9], 0
    %15 = vsyncpa [#allocation4], 0
    // Predicated region
    $region2: #{tpu_custom_call.1} parent=1 // pred_check
      _
    $region3: #{tpu_custom_call.1} parent=1 // pred_check_branch
      %17 = sbr.rel (0) target = $region5
    $region4: #{tpu_custom_call.1} parent=1 // pred_region
      %s19 = ssub.s32 128, 128
      %20 = vsyncadd [#allocation3], %s19
      %s22 = sshll.u32 [#allocation2], 4
      %s23 = int_to_ptr.vmem [resolvable:$true] %s22
      %25 = dma.hbm_to_vmem [thread:$0]  %s0, 128, %s23, [#allocation3]
    $region5: #{tpu_custom_call.1} parent=1 // pred_fallthru
      _
    // Predicated region
    $region6: #{tpu_custom_call.1} parent=1 // pred_check
      _
    $region7: #{tpu_custom_call.1} parent=1 // pred_check_branch
      %27 = sbr.rel (0) target = $region9
    $region8: #{tpu_custom_call.1} parent=1 // pred_region
      %s29 = ssub.s32 512, 512
      %30 = vsyncadd [#allocation6], %s29
      %s31 = sshll.u32 [#allocation5], 4
      %s32 = int_to_ptr.vmem [resolvable:$true] %s31
      %37 = dma.hbm_to_vmem [thread:$0]  %s1, 512, %s32, [#allocation6], 128, 128, 8
    $region9: #{tpu_custom_call.1} parent=1 // pred_fallthru
      _
    // Predicated region
    $region10: #{tpu_custom_call.1} parent=1 // pred_check
      _
    $region11: #{tpu_custom_call.1} parent=1 // pred_check_branch
      %39 = sbr.rel (0) target = $region13
    $region12: #{tpu_custom_call.1} parent=1 // pred_region
      _
    $region13: #{tpu_custom_call.1} parent=1 // pred_fallthru
      _
    // Predicated region
    $region14: #{tpu_custom_call.1} parent=1 // pred_check
      _
    $region15: #{tpu_custom_call.1} parent=1 // pred_check_branch
      %41 = sbr.rel (0) target = $region17
    $region16: #{tpu_custom_call.1} parent=1 // pred_region
      %s43 = ssub.s32 512, 512
      %44 = vsyncadd [#allocation6], %s43
      %s45 = sshll.u32 [#allocation7], 4
      %s46 = int_to_ptr.vmem [resolvable:$true] %s45
      %51 = dma.hbm_to_vmem [thread:$0]  %s3, 512, %s46, [#allocation6], 128, 128, 8
    $region17: #{tpu_custom_call.1} parent=1 // pred_fallthru
      _
    // Predicated region
    $region18: #{tpu_custom_call.1} parent=1 // pred_check
      _
    $region19: #{tpu_custom_call.1} parent=1 // pred_check_branch
      %53 = sbr.rel (0) target = $region21
    $region20: #{tpu_custom_call.1} parent=1 // pred_region
      _
    $region21: #{tpu_custom_call.1} parent=1 // pred_fallthru
      _
    // Predicated region
    $region22: #{tpu_custom_call.1} parent=1 // pred_check
      _
    $region23: #{tpu_custom_call.1} parent=1 // pred_check_branch
      %55 = sbr.rel (0) target = $region25
    $region24: #{tpu_custom_call.1} parent=1 // pred_region
      %s57 = ssub.s32 512, 512
      %58 = vsyncadd [#allocation9], %s57
      %s59 = sshll.u32 [#allocation8], 4
      %s60 = int_to_ptr.vmem [resolvable:$true] %s59
      %65 = dma.hbm_to_vmem [thread:$0]  %s5, 512, %s60, [#allocation9], 128, 128, 8
    $region25: #{tpu_custom_call.1} parent=1 // pred_fallthru
      _
    // Predicated region
    $region26: #{tpu_custom_call.1} parent=1 // pred_check
      _
    $region27: #{tpu_custom_call.1} parent=1 // pred_check_branch
      %67 = sbr.rel (0) target = $region29
    $region28: #{tpu_custom_call.1} parent=1 // pred_region
      _
    $region29: #{tpu_custom_call.1} parent=1 // pred_fallthru
      _
    // Predicated region
    $region30: #{tpu_custom_call.1} parent=1 // pred_check
      _
    $region31: #{tpu_custom_call.1} parent=1 // pred_check_branch
      %69 = sbr.rel (0) target = $region33
    $region32: #{tpu_custom_call.1} parent=1 // pred_region
      %70 = dma.done [#allocation3], 128
    $region33: #{tpu_custom_call.1} parent=1 // pred_fallthru
      _
    // Predicated region
    $region34: #{tpu_custom_call.1} parent=1 // pred_check
      _
    $region35: #{tpu_custom_call.1} parent=1 // pred_check_branch
      %72 = sbr.rel (0) target = $region37
    $region36: #{tpu_custom_call.1} parent=1 // pred_region
      %73 = dma.done [#allocation6], 512
    $region37: #{tpu_custom_call.1} parent=1 // pred_fallthru
      _
    // Predicated region
    $region38: #{tpu_custom_call.1} parent=1 // pred_check
      _
    $region39: #{tpu_custom_call.1} parent=1 // pred_check_branch
      %75 = sbr.rel (0) target = $region41
    $region40: #{tpu_custom_call.1} parent=1 // pred_region
      %76 = dma.done [#allocation6], 512
    $region41: #{tpu_custom_call.1} parent=1 // pred_fallthru
      _
    // Predicated region
    $region42: #{tpu_custom_call.1} parent=1 // pred_check
      _
    $region43: #{tpu_custom_call.1} parent=1 // pred_check_branch
      %78 = sbr.rel (0) target = $region45
    $region44: #{tpu_custom_call.1} parent=1 // pred_region
      %79 = dma.done [#allocation9], 512
    $region45: #{tpu_custom_call.1} parent=1 // pred_fallthru
      _
    %v80 = vld [vmem:[#allocation2] sm:$0xff]
    %v81 = vld [vmem:[#allocation5] sm:$0xff]
    %v82 = vld [vmem:[#allocation5 + $0x8] sm:$0xff]
    %v83 = vld [vmem:[#allocation5 + $0x10] sm:$0xff]
    %v84 = vld [vmem:[#allocation5 + $0x18] sm:$0xff]
    %v85 = vld [vmem:[%s2] sm:$0x1]
    %v87 = vlaneseq
    %v88 = vshrl.u32 %v87, 7
    %v89 = vsub.s32 0, %v88
    %v90 = vrot.slane %v85, %v89
    %vm92 = vcmask 261120
    %v94 = vsel %vm92, %v80, 0
    %96 = vmatprep.subr.mxu0 0.0
    %97 = vmatpush1.msra.mxu0 0.0
    %98 = vmatprep.subr.mxu0 0.0
    %99 = vmatpush1.msra.mxu0 0.0
    %100 = vmatprep.subr.mxu0 0.0
    %101 = vmatpush1.msra.mxu0 0.0
    %102 = vmatprep.subr.mxu0 0.0
    %103 = vmatpush1.msra.mxu0 0.0
    %104 = vmatprep.subr.mxu0 0.0
    %105 = vmatpush1.msra.mxu0 0.0
    %106 = vmatprep.subr.mxu0 0.0
    %107 = vmatpush1.msra.mxu0 0.0
    %108 = vmatprep.subr.mxu0 0.0
    %109 = vmatpush1.msra.mxu0 0.0
    %110 = vmatprep.subr.mxu0 0.0
    %111 = vmatpush1.msra.mxu0 0.0
    %112 = vmatprep.subr.mxu0 0.0
    %113 = vmatpush1.msra.mxu0 0.0
    %114 = vmatprep.subr.mxu0 0.0
    %115 = vmatpush1.msra.mxu0 0.0
    %116 = vmatprep.subr.mxu0 0.0
    %117 = vmatpush1.msra.mxu0 0.0
    %118 = vmatprep.subr.mxu0 0.0
    %119 = vmatpush1.msra.mxu0 0.0
    %120 = vmatprep.subr.mxu0 0.0
    %121 = vmatpush1.msra.mxu0 %v84
    %122 = vmatprep.subr.mxu0 0.0
    %123 = vmatpush1.msra.mxu0 %v83
    %124 = vmatprep.subr.mxu0 0.0
    %125 = vmatpush1.msra.mxu0 %v82
    %126 = vmatprep.subr.mxu0 0.0
    %127 = vmatpush1.msra.mxu0 %v81
    %128 = vmatprep.subr.mxu0 0.0
    %129 = vmatpush2.msra.mxu0 0.0
    %130 = vmatprep.subr.mxu0 0.0
    %131 = vmatpush2.msra.mxu0 0.0
    %132 = vmatprep.subr.mxu0 0.0
    %133 = vmatpush2.msra.mxu0 0.0
    %134 = vmatprep.subr.mxu0 0.0
    %135 = vmatpush2.msra.mxu0 0.0
    %136 = vmatprep.subr.mxu0 0.0
    %137 = vmatpush2.msra.mxu0 0.0
    %138 = vmatprep.subr.mxu0 0.0
    %139 = vmatpush2.msra.mxu0 0.0
    %140 = vmatprep.subr.mxu0 0.0
    %141 = vmatpush2.msra.mxu0 0.0
    %142 = vmatprep.subr.mxu0 0.0
    %143 = vmatpush2.msra.mxu0 0.0
    %144 = vmatprep.subr.mxu0 0.0
    %145 = vmatpush2.msra.mxu0 0.0
    %146 = vmatprep.subr.mxu0 0.0
    %147 = vmatpush2.msra.mxu0 0.0
    %148 = vmatprep.subr.mxu0 0.0
    %149 = vmatpush2.msra.mxu0 0.0
    %150 = vmatprep.subr.mxu0 0.0
    %151 = vmatpush2.msra.mxu0 0.0
    %152 = vmatprep.subr.mxu0 0.0
    %153 = vmatpush2.msra.mxu0 0.0
    %154 = vmatprep.subr.mxu0 0.0
    %155 = vmatpush2.msra.mxu0 0.0
    %156 = vmatprep.subr.mxu0 0.0
    %157 = vmatpush2.msra.mxu0 0.0
    %158 = vmatprep.subr.mxu0 0.0
    %159 = vmatpush2.msra.mxu0 0.0
    %160 = vmatprep.mubr.f32.mxu0 0.0
    %161 = vmatmul.mubr.f32.gmra.mxu0 %v94
    %v162 = vpop.f32.mrf.mxu0
    %v163 = vadd.f32 %v90, %v162
    %v164 = vpop.f32.mrf.mxu0
    %165 = vdwg.mxu0
    %v166 = vmax.f32 %v163, 0.0
    %v167 = vld [vmem:[#allocation7] sm:$0xff]
    %v168 = vld [vmem:[#allocation7 + $0x8] sm:$0xff]
    %v169 = vld [vmem:[#allocation7 + $0x10] sm:$0xff]
    %v170 = vld [vmem:[#allocation7 + $0x18] sm:$0xff]
    %v171 = vld [vmem:[%s4] sm:$0x1]
    %v173 = vlaneseq
    %v174 = vshrl.u32 %v173, 7
    %v175 = vsub.s32 0, %v174
    %v176 = vrot.slane %v171, %v175
    %v179 = vsel %vm92, %v166, 0
    %181 = vmatprep.subr.mxu0 0.0
    %182 = vmatpush1.msra.mxu0 0.0
    %183 = vmatprep.subr.mxu0 0.0
    %184 = vmatpush1.msra.mxu0 0.0
    %185 = vmatprep.subr.mxu0 0.0
    %186 = vmatpush1.msra.mxu0 0.0
    %187 = vmatprep.subr.mxu0 0.0
    %188 = vmatpush1.msra.mxu0 0.0
    %189 = vmatprep.subr.mxu0 0.0
    %190 = vmatpush1.msra.mxu0 0.0
    %191 = vmatprep.subr.mxu0 0.0
    %192 = vmatpush1.msra.mxu0 0.0
    %193 = vmatprep.subr.mxu0 0.0
    %194 = vmatpush1.msra.mxu0 0.0
    %195 = vmatprep.subr.mxu0 0.0
    %196 = vmatpush1.msra.mxu0 0.0
    %197 = vmatprep.subr.mxu0 0.0
    %198 = vmatpush1.msra.mxu0 0.0
    %199 = vmatprep.subr.mxu0 0.0
    %200 = vmatpush1.msra.mxu0 0.0
    %201 = vmatprep.subr.mxu0 0.0
    %202 = vmatpush1.msra.mxu0 0.0
    %203 = vmatprep.subr.mxu0 0.0
    %204 = vmatpush1.msra.mxu0 0.0
    %205 = vmatprep.subr.mxu0 0.0
    %206 = vmatpush1.msra.mxu0 %v170
    %207 = vmatprep.subr.mxu0 0.0
    %208 = vmatpush1.msra.mxu0 %v169
    %209 = vmatprep.subr.mxu0 0.0
    %210 = vmatpush1.msra.mxu0 %v168
    %211 = vmatprep.subr.mxu0 0.0
    %212 = vmatpush1.msra.mxu0 %v167
    %213 = vmatprep.subr.mxu0 0.0
    %214 = vmatpush2.msra.mxu0 0.0
    %215 = vmatprep.subr.mxu0 0.0
    %216 = vmatpush2.msra.mxu0 0.0
    %217 = vmatprep.subr.mxu0 0.0
    %218 = vmatpush2.msra.mxu0 0.0
    %219 = vmatprep.subr.mxu0 0.0
    %220 = vmatpush2.msra.mxu0 0.0
    %221 = vmatprep.subr.mxu0 0.0
    %222 = vmatpush2.msra.mxu0 0.0
    %223 = vmatprep.subr.mxu0 0.0
    %224 = vmatpush2.msra.mxu0 0.0
    %225 = vmatprep.subr.mxu0 0.0
    %226 = vmatpush2.msra.mxu0 0.0
    %227 = vmatprep.subr.mxu0 0.0
    %228 = vmatpush2.msra.mxu0 0.0
    %229 = vmatprep.subr.mxu0 0.0
    %230 = vmatpush2.msra.mxu0 0.0
    %231 = vmatprep.subr.mxu0 0.0
    %232 = vmatpush2.msra.mxu0 0.0
    %233 = vmatprep.subr.mxu0 0.0
    %234 = vmatpush2.msra.mxu0 0.0
    %235 = vmatprep.subr.mxu0 0.0
    %236 = vmatpush2.msra.mxu0 0.0
    %237 = vmatprep.subr.mxu0 0.0
    %238 = vmatpush2.msra.mxu0 0.0
    %239 = vmatprep.subr.mxu0 0.0
    %240 = vmatpush2.msra.mxu0 0.0
    %241 = vmatprep.subr.mxu0 0.0
    %242 = vmatpush2.msra.mxu0 0.0
    %243 = vmatprep.subr.mxu0 0.0
    %244 = vmatpush2.msra.mxu0 0.0
    %245 = vmatprep.mubr.f32.mxu0 0.0
    %246 = vmatmul.mubr.f32.gmra.mxu0 %v179
    %v247 = vpop.f32.mrf.mxu0
    %v248 = vadd.f32 %v176, %v247
    %v249 = vpop.f32.mrf.mxu0
    %250 = vdwg.mxu0
    %v251 = vld [vmem:[#allocation8] sm:$0xff]
    %v252 = vld [vmem:[#allocation8 + $0x8] sm:$0xff]
    %v253 = vld [vmem:[#allocation8 + $0x10] sm:$0xff]
    %v254 = vld [vmem:[#allocation8 + $0x18] sm:$0xff]
    %v255 = vld [vmem:[%s6] sm:$0x1]
    %v257 = vlaneseq
    %v258 = vshrl.u32 %v257, 7
    %v259 = vsub.s32 0, %v258
    %v260 = vrot.slane %v255, %v259
    %v263 = vsel %vm92, %v248, 0
    %265 = vmatprep.subr.mxu0 0.0
    %266 = vmatpush1.msra.mxu0 0.0
    %267 = vmatprep.subr.mxu0 0.0
    %268 = vmatpush1.msra.mxu0 0.0
    %269 = vmatprep.subr.mxu0 0.0
    %270 = vmatpush1.msra.mxu0 0.0
    %271 = vmatprep.subr.mxu0 0.0
    %272 = vmatpush1.msra.mxu0 0.0
    %273 = vmatprep.subr.mxu0 0.0
    %274 = vmatpush1.msra.mxu0 0.0
    %275 = vmatprep.subr.mxu0 0.0
    %276 = vmatpush1.msra.mxu0 0.0
    %277 = vmatprep.subr.mxu0 0.0
    %278 = vmatpush1.msra.mxu0 0.0
    %279 = vmatprep.subr.mxu0 0.0
    %280 = vmatpush1.msra.mxu0 0.0
    %281 = vmatprep.subr.mxu0 0.0
    %282 = vmatpush1.msra.mxu0 0.0
    %283 = vmatprep.subr.mxu0 0.0
    %284 = vmatpush1.msra.mxu0 0.0
    %285 = vmatprep.subr.mxu0 0.0
    %286 = vmatpush1.msra.mxu0 0.0
    %287 = vmatprep.subr.mxu0 0.0
    %288 = vmatpush1.msra.mxu0 0.0
    %289 = vmatprep.subr.mxu0 0.0
    %290 = vmatpush1.msra.mxu0 %v254
    %291 = vmatprep.subr.mxu0 0.0
    %292 = vmatpush1.msra.mxu0 %v253
    %293 = vmatprep.subr.mxu0 0.0
    %294 = vmatpush1.msra.mxu0 %v252
    %295 = vmatprep.subr.mxu0 0.0
    %296 = vmatpush1.msra.mxu0 %v251
    %297 = vmatprep.subr.mxu0 0.0
    %298 = vmatpush2.msra.mxu0 0.0
    %299 = vmatprep.subr.mxu0 0.0
    %300 = vmatpush2.msra.mxu0 0.0
    %301 = vmatprep.subr.mxu0 0.0
    %302 = vmatpush2.msra.mxu0 0.0
    %303 = vmatprep.subr.mxu0 0.0
    %304 = vmatpush2.msra.mxu0 0.0
    %305 = vmatprep.subr.mxu0 0.0
    %306 = vmatpush2.msra.mxu0 0.0
    %307 = vmatprep.subr.mxu0 0.0
    %308 = vmatpush2.msra.mxu0 0.0
    %309 = vmatprep.subr.mxu0 0.0
    %310 = vmatpush2.msra.mxu0 0.0
    %311 = vmatprep.subr.mxu0 0.0
    %312 = vmatpush2.msra.mxu0 0.0
    %313 = vmatprep.subr.mxu0 0.0
    %314 = vmatpush2.msra.mxu0 0.0
    %315 = vmatprep.subr.mxu0 0.0
    %316 = vmatpush2.msra.mxu0 0.0
    %317 = vmatprep.subr.mxu0 0.0
    %318 = vmatpush2.msra.mxu0 0.0
    %319 = vmatprep.subr.mxu0 0.0
    %320 = vmatpush2.msra.mxu0 0.0
    %321 = vmatprep.subr.mxu0 0.0
    %322 = vmatpush2.msra.mxu0 0.0
    %323 = vmatprep.subr.mxu0 0.0
    %324 = vmatpush2.msra.mxu0 0.0
    %325 = vmatprep.subr.mxu0 0.0
    %326 = vmatpush2.msra.mxu0 0.0
    %327 = vmatprep.subr.mxu0 0.0
    %328 = vmatpush2.msra.mxu0 0.0
    %329 = vmatprep.mubr.f32.mxu0 0.0
    %330 = vmatmul.mubr.f32.gmra.mxu0 %v263
    %v331 = vpop.f32.mrf.mxu0
    %v332 = vadd.f32 %v260, %v331
    %v333 = vpop.f32.mrf.mxu0
    %334 = vdwg.mxu0
    %335 = vset.pattern.permute.xlu0 24
    %336 = vperm.xlu0 %335, %v80
    %v337 = vpop.permute.xlu0 %336
    %v339 = vmul.f32 %v337, %v332
    %341 = vrot.lane.b32.xlu0 %v339, 120
    %v342 = vpop.permute.xlu0 %341
    %v344 = vadd.f32 %v332, %v342
    %345 = vset.pattern.permute.xlu0 25
    %346 = vperm.xlu0 %345, %v80
    %v347 = vpop.permute.xlu0 %346
    %v349 = vmul.f32 %v347, %v332
    %351 = vrot.lane.b32.xlu0 %v349, 116
    %v352 = vpop.permute.xlu0 %351
    %v354 = vadd.f32 %v344, %v352
    %355 = vset.pattern.permute.xlu0 26
    %356 = vperm.xlu0 %355, %v80
    %v357 = vpop.permute.xlu0 %356
    %v359 = vmul.f32 %v357, %v332
    %361 = vrot.lane.b32.xlu0 %v359, 112
    %v362 = vpop.permute.xlu0 %361
    %v364 = vadd.f32 %v354, %v362
    %365 = vset.pattern.permute.xlu0 27
    %366 = vperm.xlu0 %365, %v80
    %v367 = vpop.permute.xlu0 %366
    %v369 = vmul.f32 %v367, %v332
    %371 = vrot.lane.b32.xlu0 %v369, 108
    %v372 = vpop.permute.xlu0 %371
    %v374 = vadd.f32 %v364, %v372
    %375 = vset.pattern.permute.xlu0 28
    %376 = vperm.xlu0 %375, %v80
    %v377 = vpop.permute.xlu0 %376
    %v379 = vmul.f32 %v377, %v332
    %381 = vrot.lane.b32.xlu0 %v379, 104
    %v382 = vpop.permute.xlu0 %381
    %v384 = vadd.f32 %v374, %v382
    %385 = vset.pattern.permute.xlu0 29
    %386 = vperm.xlu0 %385, %v80
    %v387 = vpop.permute.xlu0 %386
    %v389 = vmul.f32 %v387, %v332
    %391 = vrot.lane.b32.xlu0 %v389, 100
    %v392 = vpop.permute.xlu0 %391
    %v394 = vadd.f32 %v384, %v392
    %395 = vset.pattern.permute.xlu0 30
    %396 = vperm.xlu0 %395, %v80
    %v397 = vpop.permute.xlu0 %396
    %v399 = vmul.f32 %v397, %v332
    %401 = vrot.lane.b32.xlu0 %v399, 96
    %v402 = vpop.permute.xlu0 %401
    %v404 = vadd.f32 %v394, %v402
    %405 = vset.pattern.permute.xlu0 31
    %406 = vperm.xlu0 %405, %v80
    %v407 = vpop.permute.xlu0 %406
    %v409 = vmul.f32 %v407, %v332
    %411 = vrot.lane.b32.xlu0 %v409, 92
    %v412 = vpop.permute.xlu0 %411
    %v414 = vadd.f32 %v404, %v412
    %v415 = vtanh.pop %v332
    %v416 = vadd.f32 %v415, 1.0
    %v417 = vmul.f32 %v416, 3.5
    %v418 = vadd.f32 %v417, -5.0
    %vm419 = vcmask 31744
    %v420 = vsel %vm419, %v414, %v418
    %vm421 = vcmask 64512
    %422 = vst.msk [vmem:[#allocation10] sm:$0xff] %vm421, %v420
    // Predicated region
    $region46: #{tpu_custom_call.1} parent=1 // pred_check
      _
    $region47: #{tpu_custom_call.1} parent=1 // pred_check_branch
      %424 = sbr.rel (0) target = $region49
    $region48: #{tpu_custom_call.1} parent=1 // pred_region
      %s426 = ssub.s32 128, 128
      %427 = vsyncadd [#allocation4], %s426
      %s429 = sshll.u32 [#allocation10], 4
      %s430 = int_to_ptr.vmem [resolvable:$true] %s429
      %432 = dma.vmem_to_hbm [thread:$0]  %s430, 128, %s7, [#allocation4]
    $region49: #{tpu_custom_call.1} parent=1 // pred_fallthru
      _
    // Predicated region
    $region50: #{tpu_custom_call.1} parent=1 // pred_check
      _
    $region51: #{tpu_custom_call.1} parent=1 // pred_check_branch
      %434 = sbr.rel (0) target = $region53
    $region52: #{tpu_custom_call.1} parent=1 // pred_region
      %435 = dma.done [#allocation4], 128
    $region53: #{tpu_custom_call.1} parent=1 // pred_fallthru
      _
    %436 = vsyncpa [#allocation3], 1
    %437 = vsyncpa [#allocation6], 1
    %438 = vsyncpa [#allocation9], 1
    %439 = vsyncpa [#allocation4], 1

</llo_original>
